<compile_context>
chip_gen: v6e
topology: v6e:2x2x1
jax: 0.10.0
libtpu: 0.0.40
codegen_flags: <defaults>
</compile_context>

<pallas_src>
import functools

import jax
import jax.numpy as jnp
from jax.experimental import pallas as pl
from jax.experimental.pallas import tpu as pltpu

_NCORE = 2  # leading "parallel" grid axis (megacore split on v7x)


def _shift_host(a, s, axis):
    """out[..., i, ...] = a[..., i+s, ...] with zero fill outside bounds (static s)."""
    n = a.shape[axis]
    if s == 0:
        return a
    if s > 0:
        body = jax.lax.slice_in_dim(a, s, n, axis=axis)
        pad = jnp.zeros_like(jax.lax.slice_in_dim(a, 0, s, axis=axis))
        return jnp.concatenate([body, pad], axis=axis)
    body = jax.lax.slice_in_dim(a, 0, n + s, axis=axis)
    pad = jnp.zeros_like(jax.lax.slice_in_dim(a, 0, -s, axis=axis))
    return jnp.concatenate([pad, body], axis=axis)


def _shift_tpu(a, s, axis):
    """Same semantics as _shift_host, but in-kernel: XLU roll + VPU mask."""
    ax = axis % a.ndim
    n = a.shape[ax]
    if s == 0:
        return a
    if abs(s) >= n:
        return jnp.zeros_like(a)
    rolled = pltpu.roll(a, (-s) % n, ax)        # rolled[i] = a[(i + s) mod n]
    idx = jax.lax.broadcasted_iota(jnp.int32, a.shape, ax)
    keep = idx < (n - s) if s > 0 else idx >= (-s)
    return jnp.where(keep, rolled, 0.0)


def _finite_diff_2d(a, kernel_size, shift_fn):
    """Central finite differences along the last two axes, zero 'same' padding."""
    pad = kernel_size // 2
    hi = kernel_size - 1 - pad
    lo = pad
    gx = shift_fn(a, hi, -1) - shift_fn(a, -lo, -1)  # d/dW
    gy = shift_fn(a, hi, -2) - shift_fn(a, -lo, -2)  # d/dH
    return gx, gy


def _msgex_kernel(x_ref, t_ref, s_ref, err_ref, sem_ref, *, kernel_size):
    """One grid step = TBC (b, c) planes.  The (1, H, W) output blocks stay
    resident across the inner ("arbitrary") axis and accumulate vector partials:
      err_ref:  sum over planes of sem * (dgx^2 + dgy^2)
      sem_ref:  sum over planes of sem
    The expensive cross-lane reduction is deferred to the wrapper."""
    step = pl.program_id(1)

    @pl.when(step == 0)
    def _():
        err_ref[...] = jnp.zeros_like(err_ref)
        sem_ref[...] = jnp.zeros_like(sem_ref)

    # Linearity: fd(t) - fd(x) == fd(t - x); run the stencil once on the residual.
    d = t_ref[...].astype(jnp.float32) - x_ref[...].astype(jnp.float32)
    s = s_ref[...].astype(jnp.float32)

    dx, dy = _finite_diff_2d(d, kernel_size, _shift_tpu)
    err = s * (dx * dx + dy * dy)

    # Reduce only over the plane axis (cheap vector adds), keep (H, W) partials.
    err_ref[...] += jnp.sum(err, axis=0, keepdims=True)
    sem_ref[...] += jnp.sum(s, axis=0, keepdims=True)


def msgex_loss(inputs, targets, sem_label, kernel_size=3):
    """Pallas implementation of MSGExLoss.forward. inputs/targets/sem_label: (B, C, H, W).
    Inputs are consumed in their native dtype (cast to f32 inside the kernel)."""
    B, C, H, W = inputs.shape
    bc = B * C
    x = inputs.reshape(bc, H, W)
    t = targets.reshape(bc, H, W)
    s = sem_label.reshape(bc, H, W)

    # Planes per grid step: target ~2 MiB per input block, but no more than
    # needed to give each lane of the parallel axis at least one step.
    itemsize = max(x.dtype.itemsize, t.dtype.itemsize, s.dtype.itemsize)
    plane_bytes = H * W * itemsize
    tbc = int(max(1, min((2 << 20) // max(1, plane_bytes),
                         int(pl.cdiv(bc, _NCORE)))))
    steps_per_core = int(pl.cdiv(bc, _NCORE * tbc))
    padded_bc = _NCORE * steps_per_core * tbc
    if padded_bc != bc:
        pad = ((0, padded_bc - bc), (0, 0), (0, 0))
        x = jnp.pad(x, pad)
        t = jnp.pad(t, pad)
        s = jnp.pad(s, pad)  # zero-mask padding planes contribute nothing

    in_spec = pl.BlockSpec((tbc, H, W),
                           lambda c, i: (c * steps_per_core + i, 0, 0))
    out_spec = pl.BlockSpec((1, H, W), lambda c, i: (c, 0, 0))
    out_shape = jax.ShapeDtypeStruct((_NCORE, H, W), jnp.float32)

    # VMEM budget: 3 inputs x 2 pipeline buffers x block + resident outputs.
    block_bytes = tbc * H * W * max(itemsize, 4)
    vmem_limit = int(min(48 << 20, max(32 << 20, 8 * block_bytes)))

    err_part, sem_part = pl.pallas_call(
        functools.partial(_msgex_kernel, kernel_size=kernel_size),
        out_shape=(out_shape, out_shape),
        grid=(_NCORE, steps_per_core),
        in_specs=[in_spec, in_spec, in_spec],
        out_specs=(out_spec, out_spec),
        compiler_params=pltpu.CompilerParams(
            dimension_semantics=("parallel", "arbitrary"),
            vmem_limit_bytes=vmem_limit),
    )(x, t, s)

    err_sum = jnp.sum(err_part)
    mask_sum = jnp.sum(sem_part)
    # sem_label is concatenated with itself along channels in the reference,
    # so the denominator is 2 * sum(sem_label).
    return err_sum / (2.0 * mask_sum + 1e-8)


def msgex_loss_ref(inputs, targets, sem_label, kernel_size=3):
    """Pure-JAX reference mirroring the PyTorch module semantics."""
    def fd(a):  # (B, C, H, W) -> (B, 2C, H, W) = cat([gx, gy], dim=1)
        gx, gy = _finite_diff_2d(a, kernel_size, _shift_host)
        return jnp.concatenate([gx, gy], axis=1)

    i = fd(inputs.astype(jnp.float32))
    t = fd(targets.astype(jnp.float32))
    s = jnp.concatenate([sem_label, sem_label], axis=1).astype(jnp.float32)
    d = t - i
    return jnp.sum(s * (d * d)) / (jnp.sum(s) + 1e-8)


if __name__ == "__main__":
    key = jax.random.PRNGKey(0)
    k_in, k_tg, k_sm = jax.random.split(key, 3)

    B, C, H, W = 2, 2, 16, 16
    inputs = jax.random.normal(k_in, (B, C, H, W), dtype=jnp.float32)
    targets = jax.random.normal(k_tg, (B, C, H, W), dtype=jnp.float32)
    # binary semantic mask (1 = foreground, 0 = background)
    sem_label = (jax.random.uniform(k_sm, (B, C, H, W)) > 0.5).astype(jnp.float32)

    loss = jax.block_until_ready(msgex_loss(inputs, targets, sem_label, kernel_size=3))
    ref = jax.block_until_ready(msgex_loss_ref(inputs, targets, sem_label, kernel_size=3))

    assert jnp.allclose(loss, ref, rtol=1e-5, atol=1e-6), (loss, ref)
    print("KERNEL_OK")
</pallas_src>

<mosaic_0001>
module attributes {stable_mosaic.version = 11 : i64} {
  func.func @_msgex_kernel(%arg0: i32, %arg1: i32, %arg2: memref<2x16x16xf32, #tpu.memory_space<vmem>>, %arg3: memref<2x16x16xf32, #tpu.memory_space<vmem>>, %arg4: memref<2x16x16xf32, #tpu.memory_space<vmem>>, %arg5: memref<1x16x16xf32, #tpu.memory_space<vmem>>, %arg6: memref<1x16x16xf32, #tpu.memory_space<vmem>>) attributes {dimension_semantics = [#tpu.dimension_semantics<parallel>, #tpu.dimension_semantics<arbitrary>], iteration_bounds = array<i64: 2, 1>, scalar_prefetch = 0 : i64, scratch_operands = 0 : i64, tpu.core_type = #tpu.core_type<tc>, window_params = [{transform_indices = @transform_0, window_bounds = array<i64: 2, 16, 16>}, {transform_indices = @transform_1, window_bounds = array<i64: 2, 16, 16>}, {transform_indices = @transform_2, window_bounds = array<i64: 2, 16, 16>}, {transform_indices = @transform_3, window_bounds = array<i64: 1, 16, 16>}, {transform_indices = @transform_4, window_bounds = array<i64: 1, 16, 16>}]} {
    %c0_i32 = arith.constant 0 : i32
    %0 = arith.cmpi eq, %arg1, %c0_i32 : i32
    %1 = arith.extui %0 : i1 to i32
    %c0_i32_0 = arith.constant 0 : i32
    %2 = arith.cmpi ne, %1, %c0_i32_0 : i32
    scf.if %2 {
      %cst_32 = arith.constant 0.000000e+00 : f32
      %47 = vector.broadcast %cst_32 : f32 to vector<1x16x16xf32>
      %c0_33 = arith.constant 0 : index
      %c0_34 = arith.constant 0 : index
      %c0_35 = arith.constant 0 : index
      %48 = vector.load %arg5[%c0_33, %c0_34, %c0_35] : memref<1x16x16xf32, #tpu.memory_space<vmem>>, vector<1x16x16xf32>
      tpu.vector_store %arg5[%c0_33, %c0_34, %c0_35], %47 {strides = array<i32>} : memref<1x16x16xf32, #tpu.memory_space<vmem>>, vector<1x16x16xf32>,
      %cst_36 = arith.constant 0.000000e+00 : f32
      %49 = vector.broadcast %cst_36 : f32 to vector<1x16x16xf32>
      %c0_37 = arith.constant 0 : index
      %c0_38 = arith.constant 0 : index
      %c0_39 = arith.constant 0 : index
      %50 = vector.load %arg6[%c0_37, %c0_38, %c0_39] : memref<1x16x16xf32, #tpu.memory_space<vmem>>, vector<1x16x16xf32>
      tpu.vector_store %arg6[%c0_37, %c0_38, %c0_39], %49 {strides = array<i32>} : memref<1x16x16xf32, #tpu.memory_space<vmem>>, vector<1x16x16xf32>,
    } else {
    }
    %c0 = arith.constant 0 : index
    %c0_1 = arith.constant 0 : index
    %c0_2 = arith.constant 0 : index
    %3 = vector.load %arg3[%c0, %c0_1, %c0_2] : memref<2x16x16xf32, #tpu.memory_space<vmem>>, vector<2x16x16xf32>
    %c0_3 = arith.constant 0 : index
    %c0_4 = arith.constant 0 : index
    %c0_5 = arith.constant 0 : index
    %4 = vector.load %arg2[%c0_3, %c0_4, %c0_5] : memref<2x16x16xf32, #tpu.memory_space<vmem>>, vector<2x16x16xf32>
    %5 = arith.subf %3, %4 : vector<2x16x16xf32>
    %c0_6 = arith.constant 0 : index
    %c0_7 = arith.constant 0 : index
    %c0_8 = arith.constant 0 : index
    %6 = vector.load %arg4[%c0_6, %c0_7, %c0_8] : memref<2x16x16xf32, #tpu.memory_space<vmem>>, vector<2x16x16xf32>
    %c15_i32 = arith.constant 15 : i32
    %7 = tpu.dynamic_rotate %5 by %c15_i32 dim 2 : vector<2x16x16xf32>, i32 -> vector<2x16x16xf32>
    %8 = tpu.iota {dimensions = array<i32: 2>} : vector<2x16x16xi32>
    %c15_i32_9 = arith.constant 15 : i32
    %9 = vector.broadcast %c15_i32_9 : i32 to vector<2x16x16xi32>
    %10 = arith.cmpi slt, %8, %9 : vector<2x16x16xi32>
    %cst = arith.constant 0.000000e+00 : f32
    %11 = vector.broadcast %cst : f32 to vector<2x16x16xf32>
    %12 = arith.select %10, %7, %11 : vector<2x16x16xi1>, vector<2x16x16xf32>
    %c1_i32 = arith.constant 1 : i32
    %13 = tpu.dynamic_rotate %5 by %c1_i32 dim 2 : vector<2x16x16xf32>, i32 -> vector<2x16x16xf32>
    %14 = tpu.iota {dimensions = array<i32: 2>} : vector<2x16x16xi32>
    %c1_i32_10 = arith.constant 1 : i32
    %15 = vector.broadcast %c1_i32_10 : i32 to vector<2x16x16xi32>
    %16 = arith.cmpi sge, %14, %15 : vector<2x16x16xi32>
    %cst_11 = arith.constant 0.000000e+00 : f32
    %17 = vector.broadcast %cst_11 : f32 to vector<2x16x16xf32>
    %18 = arith.select %16, %13, %17 : vector<2x16x16xi1>, vector<2x16x16xf32>
    %19 = arith.subf %12, %18 : vector<2x16x16xf32>
    %c15_i32_12 = arith.constant 15 : i32
    %20 = tpu.dynamic_rotate %5 by %c15_i32_12 dim 1 : vector<2x16x16xf32>, i32 -> vector<2x16x16xf32>
    %21 = tpu.iota {dimensions = array<i32: 1>} : vector<2x16x16xi32>
    %c15_i32_13 = arith.constant 15 : i32
    %22 = vector.broadcast %c15_i32_13 : i32 to vector<2x16x16xi32>
    %23 = arith.cmpi slt, %21, %22 : vector<2x16x16xi32>
    %cst_14 = arith.constant 0.000000e+00 : f32
    %24 = vector.broadcast %cst_14 : f32 to vector<2x16x16xf32>
    %25 = arith.select %23, %20, %24 : vector<2x16x16xi1>, vector<2x16x16xf32>
    %c1_i32_15 = arith.constant 1 : i32
    %26 = tpu.dynamic_rotate %5 by %c1_i32_15 dim 1 : vector<2x16x16xf32>, i32 -> vector<2x16x16xf32>
    %27 = tpu.iota {dimensions = array<i32: 1>} : vector<2x16x16xi32>
    %c1_i32_16 = arith.constant 1 : i32
    %28 = vector.broadcast %c1_i32_16 : i32 to vector<2x16x16xi32>
    %29 = arith.cmpi sge, %27, %28 : vector<2x16x16xi32>
    %cst_17 = arith.constant 0.000000e+00 : f32
    %30 = vector.broadcast %cst_17 : f32 to vector<2x16x16xf32>
    %31 = arith.select %29, %26, %30 : vector<2x16x16xi1>, vector<2x16x16xf32>
    %32 = arith.subf %25, %31 : vector<2x16x16xf32>
    %33 = arith.mulf %19, %19 : vector<2x16x16xf32>
    %34 = arith.mulf %32, %32 : vector<2x16x16xf32>
    %35 = arith.addf %33, %34 : vector<2x16x16xf32>
    %36 = arith.mulf %6, %35 : vector<2x16x16xf32>
    %c0_18 = arith.constant 0 : index
    %c0_19 = arith.constant 0 : index
    %c0_20 = arith.constant 0 : index
    %37 = vector.load %arg5[%c0_18, %c0_19, %c0_20] : memref<1x16x16xf32, #tpu.memory_space<vmem>>, vector<1x16x16xf32>
    %cst_21 = arith.constant dense<0.000000e+00> : vector<16x16xf32>
    %38 = vector.multi_reduction <add>, %36, %cst_21 [0] : vector<2x16x16xf32> to vector<16x16xf32>
    %39 = vector.shape_cast %38 : vector<16x16xf32> to vector<1x16x16xf32>
    %40 = arith.addf %37, %39 : vector<1x16x16xf32>
    %c0_22 = arith.constant 0 : index
    %c0_23 = arith.constant 0 : index
    %c0_24 = arith.constant 0 : index
    %41 = vector.load %arg5[%c0_22, %c0_23, %c0_24] : memref<1x16x16xf32, #tpu.memory_space<vmem>>, vector<1x16x16xf32>
    tpu.vector_store %arg5[%c0_22, %c0_23, %c0_24], %40 {strides = array<i32>} : memref<1x16x16xf32, #tpu.memory_space<vmem>>, vector<1x16x16xf32>,
    %c0_25 = arith.constant 0 : index
    %c0_26 = arith.constant 0 : index
    %c0_27 = arith.constant 0 : index
    %42 = vector.load %arg6[%c0_25, %c0_26, %c0_27] : memref<1x16x16xf32, #tpu.memory_space<vmem>>, vector<1x16x16xf32>
    %cst_28 = arith.constant dense<0.000000e+00> : vector<16x16xf32>
    %43 = vector.multi_reduction <add>, %6, %cst_28 [0] : vector<2x16x16xf32> to vector<16x16xf32>
    %44 = vector.shape_cast %43 : vector<16x16xf32> to vector<1x16x16xf32>
    %45 = arith.addf %42, %44 : vector<1x16x16xf32>
    %c0_29 = arith.constant 0 : index
    %c0_30 = arith.constant 0 : index
    %c0_31 = arith.constant 0 : index
    %46 = vector.load %arg6[%c0_29, %c0_30, %c0_31] : memref<1x16x16xf32, #tpu.memory_space<vmem>>, vector<1x16x16xf32>
    tpu.vector_store %arg6[%c0_29, %c0_30, %c0_31], %45 {strides = array<i32>} : memref<1x16x16xf32, #tpu.memory_space<vmem>>, vector<1x16x16xf32>,
    return
  }
  func.func @transform_0(%arg0: i32, %arg1: i32) -> (i32, i32, i32) {
    %c1_i32 = arith.constant 1 : i32
    %0 = arith.muli %arg0, %c1_i32 : i32
    %1 = arith.addi %0, %arg1 : i32
    %c0_i32 = arith.constant 0 : i32
    %c0_i32_0 = arith.constant 0 : i32
    %c0_i32_1 = arith.constant 0 : i32
    return %1, %c0_i32, %c0_i32_0 : i32, i32, i32
  }
  func.func @transform_1(%arg0: i32, %arg1: i32) -> (i32, i32, i32) {
    %c1_i32 = arith.constant 1 : i32
    %0 = arith.muli %arg0, %c1_i32 : i32
    %1 = arith.addi %0, %arg1 : i32
    %c0_i32 = arith.constant 0 : i32
    %c0_i32_0 = arith.constant 0 : i32
    %c0_i32_1 = arith.constant 0 : i32
    return %1, %c0_i32, %c0_i32_0 : i32, i32, i32
  }
  func.func @transform_2(%arg0: i32, %arg1: i32) -> (i32, i32, i32) {
    %c1_i32 = arith.constant 1 : i32
    %0 = arith.muli %arg0, %c1_i32 : i32
    %1 = arith.addi %0, %arg1 : i32
    %c0_i32 = arith.constant 0 : i32
    %c0_i32_0 = arith.constant 0 : i32
    %c0_i32_1 = arith.constant 0 : i32
    return %1, %c0_i32, %c0_i32_0 : i32, i32, i32
  }
  func.func @transform_3(%arg0: i32, %arg1: i32) -> (i32, i32, i32) {
    %c0_i32 = arith.constant 0 : i32
    %c0_i32_0 = arith.constant 0 : i32
    %c0_i32_1 = arith.constant 0 : i32
    return %arg0, %c0_i32, %c0_i32_0 : i32, i32, i32
  }
  func.func @transform_4(%arg0: i32, %arg1: i32) -> (i32, i32, i32) {
    %c0_i32 = arith.constant 0 : i32
    %c0_i32_0 = arith.constant 0 : i32
    %c0_i32_1 = arith.constant 0 : i32
    return %arg0, %c0_i32, %c0_i32_0 : i32, i32, i32
  }
}

</mosaic_0001>

<llo_original>
// kernel: tpu_custom_call.1
$region0: #{tpu_custom_call.1}
  #allocation0 [shape = 'u32[]', space=smem, size = 0x4, offset = 0x4, fixed_abs, tag = 'smem constant byte address 0x4 - core index']
  #allocation1 [shape = 'u32[144,128]{1,0:T(1,128)}', space=vmem, size = 0x12000, scoped, tag = 'internal scratch']
  %s0 = inlined_call_operand.hbm [shape: f32[4,16,16], index: 0, kind: input, shape index: {}]
  %s1 = inlined_call_operand.hbm [shape: f32[4,16,16], index: 1, kind: input, shape index: {}]
  %s2 = inlined_call_operand.hbm [shape: f32[4,16,16], index: 2, kind: input, shape index: {}]
  %s3 = inlined_call_operand.hbm [shape: f32[2,16,16], index: 3, kind: output, shape index: {0}]
  %s4 = inlined_call_operand.hbm [shape: f32[2,16,16], index: 4, kind: output, shape index: {1}]
  %5 = xla_tuple %s3, %s4
  %s6 = sld [smem:[#allocation0]]
  $region69: #{tpu_custom_call.1} parent=0
    _
  %s8 = ssub.s32 1, %s6
  %s9 = scalar_select 0, %s8, %s6
  $region1: #{tpu_custom_call.1} parent=0
    #allocation2 [shape = 'u8[32768]{0}', space=vmem, size = 0x8000, scoped, tag = 'input window, operand 0']
    #allocation3 [shape = 's32[2]{0}', space=sflag, size = 0x8, scoped, tag = 'scoped memory for tpu_custom_call.1']
    #allocation4 [shape = 's32[2]{0}', space=sflag, size = 0x8, scoped, tag = 'scoped memory for tpu_custom_call.1']
    #allocation5 [shape = 'u8[32768]{0}', space=vmem, size = 0x8000, scoped, tag = 'input window, operand 1']
    #allocation6 [shape = 's32[2]{0}', space=sflag, size = 0x8, scoped, tag = 'scoped memory for tpu_custom_call.1']
    #allocation7 [shape = 'u8[32768]{0}', space=vmem, size = 0x8000, scoped, tag = 'input window, operand 2']
    #allocation8 [shape = 'u8[16384]{0}', space=vmem, size = 0x4000, scoped, tag = 'output window, operand 0']
    #allocation9 [shape = 'u8[16384]{0}', space=vmem, size = 0x4000, scoped, tag = 'output window, operand 1']
    #allocation10 [shape = 's32[2]{0}', space=sflag, size = 0x8, scoped, tag = 'scoped memory for tpu_custom_call.1']
    %10 = vsyncpa [#allocation3], 0
    %s11 = scalar_lea.sflag [#allocation3], 1
    %12 = vsyncpa %s11, 0
    %13 = vsyncpa [#allocation6], 0
    %s14 = scalar_lea.sflag [#allocation6], 1
    %15 = vsyncpa %s14, 0
    %16 = vsyncpa [#allocation4], 0
    %s17 = scalar_lea.sflag [#allocation4], 1
    %18 = vsyncpa %s17, 0
    %19 = vsyncpa [#allocation10], 0
    %s20 = scalar_lea.sflag [#allocation10], 1
    %21 = vsyncpa %s20, 0
    loop: start=0, step=1, limit=4
    $region2: #{tpu_custom_call.1} parent=1 // loop_pre_header
      _
    $region3: #{tpu_custom_call.1} parent=1 // loop_header
      %s23 = sphi 0, %s27
      %p24 = scmp.ge.s32.totalorder %s23, 4
      %s30 = sphi 0, %s42
      %s31 = sphi 0, %s38
      %s32 = sphi 0, %s30
      %s33 = sphi 0, %s31
      %s34 = sphi 0, %s32
      %s35 = sphi 0, %s33
      %s47 = sphi 0, %s49
      %s50 = sphi 0, %s47
      %s51 = sphi 0, %s50
      %s67 = sphi 0, %s51
      %s75 = sphi 0, %s77
      %s78 = sphi 0, %s75
      %s79 = sphi 0, %s78
      %s95 = sphi 0, %s79
      %s103 = sphi 0, %s105
      %s106 = sphi 0, %s103
      %s107 = sphi 0, %s106
      %s123 = sphi 0, %s107
      %s129 = sphi 0, %s131
      %s132 = sphi 0, %s129
      %s133 = sphi 0, %s132
      %s149 = sphi 0, %s133
      %s155 = sphi 0, %s157
      %s158 = sphi 0, %s155
      %s159 = sphi 0, %s158
      %s175 = sphi 0, %s159
    $region4: #{tpu_custom_call.1} parent=1 // loop_header_branch
      %26 = sbr.rel (%p24) target = $region8
    $region5: #{tpu_custom_call.1} parent=1 // loop_body
      %s28 = ssub.s32 %s23, 1
      %s29 = ssub.s32 %s23, 2
      %s36 = sadd.s32 1, %s31
      %p37 = scmp.ge.s32.totalorder %s36, 1
      %s38 = scalar_select %p37, 0, %s36
      %s39 = sadd.s32 1, %s30
      %s40 = scalar_select %p37, %s39, %s30
      %p41 = scmp.ge.s32.totalorder %s40, 2
      %s42 = scalar_select %p41, 0, %s40
      %s43 = sadd.s32 %s30, %s31
      %s44 = sadd.s32 %s42, %s38
      %s45 = ssub.s32 %s43, %s44
      %p46 = scmp.eq.s32.totalorder %s45, 0
      %s48 = sadd.s32 %s47, 1
      %s49 = scalar_select %p46, %s47, %s48
      %p52 = pneg %p46
      %p53 = scmp.eq.s32.totalorder %s23, 1
      %p54 = por %p52, %p53
      %p55 = scmp.ne.s32.totalorder %s47, %s50
      %p56 = scmp.eq.s32.totalorder %s23, 0
      %p57 = por %p55, %p56
      %p58 = scmp.ne.s32.totalorder %s47, %s50
      %p59 = scmp.eq.s32.totalorder %s28, 1
      %p60 = por %p58, %p59
      %p61 = scmp.ne.s32.totalorder %s50, %s51
      %p62 = scmp.eq.s32.totalorder %s28, 0
      %p63 = por %p61, %p62
      %p64 = scmp.ne.s32.totalorder %s50, %s51
      %p65 = scmp.eq.s32.totalorder %s29, 1
      %p66 = por %p64, %p65
      %p68 = scmp.ne.s32.totalorder %s51, %s67
      %p69 = scmp.eq.s32.totalorder %s29, 0
      %p70 = por %p68, %p69
      %s71 = sadd.s32 %s30, %s31
      %s72 = sadd.s32 %s42, %s38
      %s73 = ssub.s32 %s71, %s72
      %p74 = scmp.eq.s32.totalorder %s73, 0
      %s76 = sadd.s32 %s75, 1
      %s77 = scalar_select %p74, %s75, %s76
      %p80 = pneg %p74
      %p81 = scmp.eq.s32.totalorder %s23, 1
      %p82 = por %p80, %p81
      %p83 = scmp.ne.s32.totalorder %s75, %s78
      %p84 = scmp.eq.s32.totalorder %s23, 0
      %p85 = por %p83, %p84
      %p86 = scmp.ne.s32.totalorder %s75, %s78
      %p87 = scmp.eq.s32.totalorder %s28, 1
      %p88 = por %p86, %p87
      %p89 = scmp.ne.s32.totalorder %s78, %s79
      %p90 = scmp.eq.s32.totalorder %s28, 0
      %p91 = por %p89, %p90
      %p92 = scmp.ne.s32.totalorder %s78, %s79
      %p93 = scmp.eq.s32.totalorder %s29, 1
      %p94 = por %p92, %p93
      %p96 = scmp.ne.s32.totalorder %s79, %s95
      %p97 = scmp.eq.s32.totalorder %s29, 0
      %p98 = por %p96, %p97
      %s99 = sadd.s32 %s30, %s31
      %s100 = sadd.s32 %s42, %s38
      %s101 = ssub.s32 %s99, %s100
      %p102 = scmp.eq.s32.totalorder %s101, 0
      %s104 = sadd.s32 %s103, 1
      %s105 = scalar_select %p102, %s103, %s104
      %p108 = pneg %p102
      %p109 = scmp.eq.s32.totalorder %s23, 1
      %p110 = por %p108, %p109
      %p111 = scmp.ne.s32.totalorder %s103, %s106
      %p112 = scmp.eq.s32.totalorder %s23, 0
      %p113 = por %p111, %p112
      %p114 = scmp.ne.s32.totalorder %s103, %s106
      %p115 = scmp.eq.s32.totalorder %s28, 1
      %p116 = por %p114, %p115
      %p117 = scmp.ne.s32.totalorder %s106, %s107
      %p118 = scmp.eq.s32.totalorder %s28, 0
      %p119 = por %p117, %p118
      %p120 = scmp.ne.s32.totalorder %s106, %s107
      %p121 = scmp.eq.s32.totalorder %s29, 1
      %p122 = por %p120, %p121
      %p124 = scmp.ne.s32.totalorder %s107, %s123
      %p125 = scmp.eq.s32.totalorder %s29, 0
      %p126 = por %p124, %p125
      %s127 = ssub.s32 %s30, %s42
      %p128 = scmp.eq.s32.totalorder %s127, 0
      %s130 = sadd.s32 %s129, 1
      %s131 = scalar_select %p128, %s129, %s130
      %p134 = pneg %p128
      %p135 = scmp.eq.s32.totalorder %s23, 1
      %p136 = por %p134, %p135
      %p137 = scmp.ne.s32.totalorder %s129, %s132
      %p138 = scmp.eq.s32.totalorder %s23, 0
      %p139 = por %p137, %p138
      %p140 = scmp.ne.s32.totalorder %s129, %s132
      %p141 = scmp.eq.s32.totalorder %s28, 1
      %p142 = por %p140, %p141
      %p143 = scmp.ne.s32.totalorder %s132, %s133
      %p144 = scmp.eq.s32.totalorder %s28, 0
      %p145 = por %p143, %p144
      %p146 = scmp.ne.s32.totalorder %s132, %s133
      %p147 = scmp.eq.s32.totalorder %s29, 1
      %p148 = por %p146, %p147
      %p150 = scmp.ne.s32.totalorder %s133, %s149
      %p151 = scmp.eq.s32.totalorder %s29, 0
      %p152 = por %p150, %p151
      %s153 = ssub.s32 %s30, %s42
      %p154 = scmp.eq.s32.totalorder %s153, 0
      %s156 = sadd.s32 %s155, 1
      %s157 = scalar_select %p154, %s155, %s156
      %p160 = pneg %p154
      %p161 = scmp.eq.s32.totalorder %s23, 1
      %p162 = por %p160, %p161
      %p163 = scmp.ne.s32.totalorder %s155, %s158
      %p164 = scmp.eq.s32.totalorder %s23, 0
      %p165 = por %p163, %p164
      %p166 = scmp.ne.s32.totalorder %s155, %s158
      %p167 = scmp.eq.s32.totalorder %s28, 1
      %p168 = por %p166, %p167
      %p169 = scmp.ne.s32.totalorder %s158, %s159
      %p170 = scmp.eq.s32.totalorder %s28, 0
      %p171 = por %p169, %p170
      %p172 = scmp.ne.s32.totalorder %s158, %s159
      %p173 = scmp.eq.s32.totalorder %s29, 1
      %p174 = por %p172, %p173
      %p176 = scmp.ne.s32.totalorder %s159, %s175
      %p177 = scmp.eq.s32.totalorder %s29, 0
      %p178 = por %p176, %p177
      %p179 = scmp.le.s32.totalorder 1, %s23
      %p180 = scmp.lt.s32.totalorder %s23, 3
      %p181 = pnand %p179, %p180
      %p182 = pneg %p181
      // Predicated region
      $region9: #{tpu_custom_call.1} parent=5 // pred_check
        _
      $region10: #{tpu_custom_call.1} parent=5 // pred_check_branch
        %184 = sbr.rel (%p181) target = $region12
      $region11: #{tpu_custom_call.1} parent=5 // pred_region
        %s185 = ssub.s32 %s23, 1
      $region12: #{tpu_custom_call.1} parent=5 // pred_fallthru
        _
      %p186 = scmp.lt.s32.totalorder %s23, 2
      // Predicated region
      $region13: #{tpu_custom_call.1} parent=5 // pred_check
        %p187 = pneg %p186
      $region14: #{tpu_custom_call.1} parent=5 // pred_check_branch
        %189 = sbr.rel (%p187) target = $region16
      $region15: #{tpu_custom_call.1} parent=5 // pred_region
        // Predicated region
        $region17: #{tpu_custom_call.1} parent=15 // pred_check
          %p190 = pneg %p57
        $region18: #{tpu_custom_call.1} parent=15 // pred_check_branch
          %192 = sbr.rel (%p190) target = $region20
        $region19: #{tpu_custom_call.1} parent=15 // pred_region
          %s193 = sand.u32 %s47, 1
          %s194 = scalar_lea.sflag [#allocation3], %s193
          %s195 = sand.u32 %s47, 1
          %s196 = smul.addr %s195, 32
          %s197 = scalar_lea.vmem [#allocation2], %s196
          %s198 = sadd.s32 %s30, %s31
          %s199 = smul.u32 2, %s198
          %s201 = ssub.s32 512, 512
          %202 = vsyncadd %s194, %s201
          %s203 = smul.addr %s199, 2
          %s204 = smul.addr %s203, 128
          %s205 = scalar_lea.hbm %s0, %s204
          %s206 = sshll.u32 %s197, 4
          %s207 = int_to_ptr.vmem [resolvable:$true] %s206
          %212 = dma.hbm_to_vmem [thread:$0]  %s205, 512, %s207, %s194, 128, 128, 8
        $region20: #{tpu_custom_call.1} parent=15 // pred_fallthru
          _
        // Predicated region
        $region21: #{tpu_custom_call.1} parent=15 // pred_check
          %p213 = pneg %p85
        $region22: #{tpu_custom_call.1} parent=15 // pred_check_branch
          %215 = sbr.rel (%p213) target = $region24
        $region23: #{tpu_custom_call.1} parent=15 // pred_region
          %s216 = sand.u32 %s23, 1
          %s217 = scalar_lea.sflag [#allocation6], %s216
          %s218 = sand.u32 %s75, 1
          %s219 = smul.addr %s218, 32
          %s220 = scalar_lea.vmem [#allocation5], %s219
          %s221 = sadd.s32 %s30, %s31
          %s222 = smul.u32 2, %s221
          %s224 = ssub.s32 512, 512
          %225 = vsyncadd %s217, %s224
          %s226 = smul.addr %s222, 2
          %s227 = smul.addr %s226, 128
          %s228 = scalar_lea.hbm %s1, %s227
          %s229 = sshll.u32 %s220, 4
          %s230 = int_to_ptr.vmem [resolvable:$true] %s229
          %235 = dma.hbm_to_vmem [thread:$0]  %s228, 512, %s230, %s217, 128, 128, 8
        $region24: #{tpu_custom_call.1} parent=15 // pred_fallthru
          _
        // Predicated region
        $region25: #{tpu_custom_call.1} parent=15 // pred_check
          %p236 = pneg %p113
        $region26: #{tpu_custom_call.1} parent=15 // pred_check_branch
          %238 = sbr.rel (%p236) target = $region28
        $region27: #{tpu_custom_call.1} parent=15 // pred_region
          %s239 = sand.u32 %s23, 1
          %s240 = scalar_lea.sflag [#allocation6], %s239
          %s241 = sand.u32 %s103, 1
          %s242 = smul.addr %s241, 32
          %s243 = scalar_lea.vmem [#allocation7], %s242
          %s244 = sadd.s32 %s30, %s31
          %s245 = smul.u32 2, %s244
          %s247 = ssub.s32 512, 512
          %248 = vsyncadd %s240, %s247
          %s249 = smul.addr %s245, 2
          %s250 = smul.addr %s249, 128
          %s251 = scalar_lea.hbm %s2, %s250
          %s252 = sshll.u32 %s243, 4
          %s253 = int_to_ptr.vmem [resolvable:$true] %s252
          %258 = dma.hbm_to_vmem [thread:$0]  %s251, 512, %s253, %s240, 128, 128, 8
        $region28: #{tpu_custom_call.1} parent=15 // pred_fallthru
          _
      $region16: #{tpu_custom_call.1} parent=5 // pred_fallthru
        _
      %p259 = scmp.le.s32.totalorder 1, %s23
      %p260 = scmp.lt.s32.totalorder %s23, 3
      %p261 = pnand %p259, %p260
      %p262 = pneg %p261
      // Predicated region
      $region29: #{tpu_custom_call.1} parent=5 // pred_check
        _
      $region30: #{tpu_custom_call.1} parent=5 // pred_check_branch
        %264 = sbr.rel (%p261) target = $region32
      $region31: #{tpu_custom_call.1} parent=5 // pred_region
        %s265 = ssub.s32 %s23, 1
        %s266 = sand.u32 %s50, 1
        %s267 = scalar_lea.sflag [#allocation3], %s266
        %s268 = sand.u32 %s50, 1
        %s269 = smul.addr %s268, 32
        %s270 = scalar_lea.vmem [#allocation2], %s269
        // Predicated region
        $region33: #{tpu_custom_call.1} parent=31 // pred_check
          %p271 = pneg %p63
        $region34: #{tpu_custom_call.1} parent=31 // pred_check_branch
          %273 = sbr.rel (%p271) target = $region36
        $region35: #{tpu_custom_call.1} parent=31 // pred_region
          %274 = dma.done %s267, 512
        $region36: #{tpu_custom_call.1} parent=31 // pred_fallthru
          _
        %s275 = sand.u32 %s28, 1
        %s276 = scalar_lea.sflag [#allocation6], %s275
        %s277 = sand.u32 %s78, 1
        %s278 = smul.addr %s277, 32
        %s279 = scalar_lea.vmem [#allocation5], %s278
        // Predicated region
        $region37: #{tpu_custom_call.1} parent=31 // pred_check
          %p280 = pneg %p91
        $region38: #{tpu_custom_call.1} parent=31 // pred_check_branch
          %282 = sbr.rel (%p280) target = $region40
        $region39: #{tpu_custom_call.1} parent=31 // pred_region
          %283 = dma.done %s276, 512
        $region40: #{tpu_custom_call.1} parent=31 // pred_fallthru
          _
        %s284 = sand.u32 %s28, 1
        %s285 = scalar_lea.sflag [#allocation6], %s284
        %s286 = sand.u32 %s106, 1
        %s287 = smul.addr %s286, 32
        %s288 = scalar_lea.vmem [#allocation7], %s287
        // Predicated region
        $region41: #{tpu_custom_call.1} parent=31 // pred_check
          %p289 = pneg %p119
        $region42: #{tpu_custom_call.1} parent=31 // pred_check_branch
          %291 = sbr.rel (%p289) target = $region44
        $region43: #{tpu_custom_call.1} parent=31 // pred_region
          %292 = dma.done %s285, 512
        $region44: #{tpu_custom_call.1} parent=31 // pred_fallthru
          _
        %s293 = sand.u32 %s50, 1
        %s294 = scalar_lea.sflag [#allocation3], %s293
        %s295 = sand.u32 %s50, 1
        %s296 = smul.addr %s295, 32
        %s297 = scalar_lea.vmem [#allocation2], %s296
        %p298 = pneg %p63
        %p299 = pneg %p60
        %s300 = sand.u32 %s28, 1
        %s301 = scalar_lea.sflag [#allocation6], %s300
        %s302 = sand.u32 %s78, 1
        %s303 = smul.addr %s302, 32
        %s304 = scalar_lea.vmem [#allocation5], %s303
        %p305 = pneg %p91
        %p306 = pneg %p88
        %s307 = sand.u32 %s28, 1
        %s308 = scalar_lea.sflag [#allocation6], %s307
        %s309 = sand.u32 %s106, 1
        %s310 = smul.addr %s309, 32
        %s311 = scalar_lea.vmem [#allocation7], %s310
        %p312 = pneg %p119
        %p313 = pneg %p116
        %p314 = pneg %p145
        %p315 = pneg %p142
        %s316 = sand.u32 %s132, 1
        %s317 = scalar_lea.sflag [#allocation4], %s316
        %s318 = sand.u32 %s132, 1
        %s319 = smul.addr %s318, 16
        %s320 = scalar_lea.vmem [#allocation8], %s319
        %p321 = pneg %p171
        %p322 = pneg %p168
        %s323 = sand.u32 %s158, 1
        %s324 = scalar_lea.sflag [#allocation10], %s323
        %s325 = sand.u32 %s158, 1
        %s326 = smul.addr %s325, 16
        %s327 = scalar_lea.vmem [#allocation9], %s326
        %s328 = sadd.s32 %s32, %s33
        %s329 = smul.u32 2, %s328
        %s330 = sadd.s32 %s32, %s33
        %s331 = smul.u32 2, %s330
        %s332 = sadd.s32 %s32, %s33
        %s333 = smul.u32 2, %s332
        %p334 = scmp.eq.s32.totalorder %s33, 0
        // Predicated region
        $region45: #{tpu_custom_call.1} parent=31 // pred_check
          %p335 = pneg %p334
        $region46: #{tpu_custom_call.1} parent=31 // pred_check_branch
          %337 = sbr.rel (%p335) target = $region48
        $region47: #{tpu_custom_call.1} parent=31 // pred_region
          %vm338 = vcmask 130048
          %339 = vst.msk [vmem:[%s320] sm:$0xff] %vm338, 0.0
          %340 = vst.msk [vmem:[%s320 + $0x8] sm:$0xff] %vm338, 0.0
          %341 = vst.msk [vmem:[%s327] sm:$0xff] %vm338, 0.0
          %342 = vst.msk [vmem:[%s327 + $0x8] sm:$0xff] %vm338, 0.0
        $region48: #{tpu_custom_call.1} parent=31 // pred_fallthru
          _
        %v343 = vld [vmem:[%s279] sm:$0xff]
        %v344 = vld [vmem:[%s279 + $0x8] sm:$0xff]
        %v345 = vld [vmem:[%s279 + $0x10] sm:$0xff]
        %v346 = vld [vmem:[%s279 + $0x18] sm:$0xff]
        %v347 = vld [vmem:[%s270] sm:$0xff]
        %v348 = vld [vmem:[%s270 + $0x8] sm:$0xff]
        %v349 = vld [vmem:[%s270 + $0x10] sm:$0xff]
        %v350 = vld [vmem:[%s270 + $0x18] sm:$0xff]
        %v351 = vsub.f32 %v343, %v347
        %v352 = vsub.f32 %v344, %v348
        %v353 = vsub.f32 %v345, %v349
        %v354 = vsub.f32 %v346, %v350
        %v355 = vld [vmem:[%s288] sm:$0xff]
        %v356 = vld [vmem:[%s288 + $0x8] sm:$0xff]
        %v357 = vld [vmem:[%s288 + $0x10] sm:$0xff]
        %v358 = vld [vmem:[%s288 + $0x18] sm:$0xff]
        %vm359 = vcmask 1047680
        %360 = vrot.lane.b32.xlu0 %v351, 16
        %v361 = vpop.permute.xlu0 %360
        %v362 = vsel %vm359, %v361, %v351
        %363 = vrot.lane.b32.xlu0 %v352, 16
        %v364 = vpop.permute.xlu0 %363
        %v365 = vsel %vm359, %v364, %v352
        %366 = vrot.lane.b32.xlu0 %v353, 16
        %v367 = vpop.permute.xlu0 %366
        %v368 = vsel %vm359, %v367, %v353
        %369 = vrot.lane.b32.xlu0 %v354, 16
        %v370 = vpop.permute.xlu0 %369
        %v371 = vsel %vm359, %v370, %v354
        %372 = vrot.lane.b32.xlu0 %v362, 16
        %v373 = vpop.permute.xlu0 %372
        %374 = vrot.lane.b32.xlu0 %v365, 16
        %v375 = vpop.permute.xlu0 %374
        %376 = vrot.lane.b32.xlu0 %v368, 16
        %v377 = vpop.permute.xlu0 %376
        %378 = vrot.lane.b32.xlu0 %v371, 16
        %v379 = vpop.permute.xlu0 %378
        %v380 = vsel %vm359, %v373, %v351
        %v381 = vsel %vm359, %v375, %v352
        %v382 = vsel %vm359, %v377, %v353
        %v383 = vsel %vm359, %v379, %v354
        %v384 = vlaneseq
        %v385 = vand.u32 %v384, 127
        %vm386 = vcmp.lt.s32.totalorder %v385, 15
        %391 = vrot.lane.b32.xlu0 %v380, 127
        %v392 = vpop.permute.xlu0 %391
        %393 = vrot.lane.b32.xlu0 %v381, 127
        %v394 = vpop.permute.xlu0 %393
        %395 = vrot.lane.b32.xlu0 %v382, 127
        %v396 = vpop.permute.xlu0 %395
        %397 = vrot.lane.b32.xlu0 %v383, 127
        %v398 = vpop.permute.xlu0 %397
        %v403 = vsel %vm386, %v392, 0.0
        %v404 = vsel %vm386, %v394, 0.0
        %v405 = vsel %vm386, %v396, 0.0
        %v406 = vsel %vm386, %v398, 0.0
        %vm407 = vcmp.ge.s32.totalorder %v385, 1
        %408 = vrot.lane.b32.xlu0 %v380, 113
        %v409 = vpop.permute.xlu0 %408
        %410 = vrot.lane.b32.xlu0 %v381, 113
        %v411 = vpop.permute.xlu0 %410
        %412 = vrot.lane.b32.xlu0 %v382, 113
        %v413 = vpop.permute.xlu0 %412
        %414 = vrot.lane.b32.xlu0 %v383, 113
        %v415 = vpop.permute.xlu0 %414
        %v420 = vsel %vm407, %v409, 0.0
        %v421 = vsel %vm407, %v411, 0.0
        %v422 = vsel %vm407, %v413, 0.0
        %v423 = vsel %vm407, %v415, 0.0
        %v424 = vsub.f32 %v403, %v420
        %v425 = vsub.f32 %v404, %v421
        %v426 = vsub.f32 %v405, %v422
        %v427 = vsub.f32 %v406, %v423
        %v428 = vrot.slane %v351, 1
        %v429 = vrot.slane %v353, 1
        %v430 = vrot.slane %v352, 1
        %v431 = vrot.slane %v354, 1
        %v432 = vlaneseq
        %v433 = vshrl.u32 %v432, 7
        %vm434 = vcmp.lt.s32.totalorder %v433, 7
        %v435 = vsel %vm434, %v428, %v430
        %v436 = vsel %vm434, %v429, %v431
        %v437 = vsel %vm434, %v430, %v428
        %v438 = vsel %vm434, %v431, %v429
        %v439 = vadd.s32 %v433, 8
        %vm440 = vcmp.lt.s32.totalorder %v433, 15
        %vm441 = vcmp.lt.s32.totalorder %v439, 15
        %v442 = vsel %vm440, %v435, 0.0
        %v443 = vsel %vm441, %v437, 0.0
        %v444 = vsel %vm440, %v436, 0.0
        %v445 = vsel %vm441, %v438, 0.0
        %v446 = vrot.slane %v351, 7
        %v447 = vrot.slane %v353, 7
        %v448 = vrot.slane %v352, 7
        %v449 = vrot.slane %v354, 7
        %vm450 = vcmp.lt.s32.totalorder %v433, 1
        %v451 = vsel %vm450, %v446, %v448
        %v452 = vsel %vm450, %v447, %v449
        %v453 = vsel %vm450, %v448, %v446
        %v454 = vsel %vm450, %v449, %v447
        %vm455 = vcmp.ge.s32.totalorder %v433, 1
        %vm456 = vcmp.ge.s32.totalorder %v439, 1
        %v457 = vsel %vm455, %v453, 0.0
        %v458 = vsel %vm456, %v451, 0.0
        %v459 = vsel %vm455, %v454, 0.0
        %v460 = vsel %vm456, %v452, 0.0
        %v461 = vsub.f32 %v442, %v457
        %v462 = vsub.f32 %v443, %v458
        %v463 = vsub.f32 %v444, %v459
        %v464 = vsub.f32 %v445, %v460
        %v465 = vmul.f32 %v424, %v424
        %v466 = vmul.f32 %v425, %v425
        %v467 = vmul.f32 %v426, %v426
        %v468 = vmul.f32 %v427, %v427
        %v469 = vmul.f32 %v461, %v461
        %v470 = vmul.f32 %v462, %v462
        %v471 = vmul.f32 %v463, %v463
        %v472 = vmul.f32 %v464, %v464
        %v473 = vadd.f32 %v465, %v469
        %v474 = vadd.f32 %v466, %v470
        %v475 = vadd.f32 %v467, %v471
        %v476 = vadd.f32 %v468, %v472
        %v477 = vmul.f32 %v355, %v473
        %v478 = vmul.f32 %v356, %v474
        %v479 = vmul.f32 %v357, %v475
        %v480 = vmul.f32 %v358, %v476
        %v481 = vld [vmem:[%s320] sm:$0xff]
        %v482 = vld [vmem:[%s320 + $0x8] sm:$0xff]
        %vm483 = vcmask 130048
        %v484 = vsel %vm483, %v477, 0.0
        %v485 = vsel %vm483, %v479, 0.0
        %v486 = vadd.f32 %v484, %v485
        %v487 = vsel %vm483, %v478, 0.0
        %v488 = vsel %vm483, %v480, 0.0
        %v489 = vadd.f32 %v487, %v488
        %v490 = vadd.f32 %v481, %v486
        %v491 = vadd.f32 %v482, %v489
        %492 = vst.msk [vmem:[%s320] sm:$0xff] %vm483, %v490
        %493 = vst.msk [vmem:[%s320 + $0x8] sm:$0xff] %vm483, %v491
        %v494 = vld [vmem:[%s327] sm:$0xff]
        %v495 = vld [vmem:[%s327 + $0x8] sm:$0xff]
        %v496 = vsel %vm483, %v355, 0.0
        %v497 = vsel %vm483, %v357, 0.0
        %v498 = vadd.f32 %v496, %v497
        %v499 = vsel %vm483, %v356, 0.0
        %v500 = vsel %vm483, %v358, 0.0
        %v501 = vadd.f32 %v499, %v500
        %v502 = vadd.f32 %v494, %v498
        %v503 = vadd.f32 %v495, %v501
        %504 = vst.msk [vmem:[%s327] sm:$0xff] %vm483, %v502
        %505 = vst.msk [vmem:[%s327 + $0x8] sm:$0xff] %vm483, %v503
        %s506 = sand.u32 %s132, 1
        %s507 = scalar_lea.sflag [#allocation4], %s506
        %s508 = sand.u32 %s132, 1
        %s509 = smul.addr %s508, 16
        %s510 = scalar_lea.vmem [#allocation8], %s509
        %s511 = sand.u32 %s158, 1
        %s512 = scalar_lea.sflag [#allocation10], %s511
        %s513 = sand.u32 %s158, 1
        %s514 = smul.addr %s513, 16
        %s515 = scalar_lea.vmem [#allocation9], %s514
        // Predicated region
        $region49: #{tpu_custom_call.1} parent=31 // pred_check
          %p516 = pneg %p142
        $region50: #{tpu_custom_call.1} parent=31 // pred_check_branch
          %518 = sbr.rel (%p516) target = $region52
        $region51: #{tpu_custom_call.1} parent=31 // pred_region
          %s520 = ssub.s32 256, 256
          %521 = vsyncadd %s507, %s520
          %s522 = smul.addr %s32, 2
          %s523 = smul.addr %s522, 128
          %s524 = scalar_lea.hbm %s3, %s523
          %s525 = sshll.u32 %s510, 4
          %s526 = int_to_ptr.vmem [resolvable:$true] %s525
          %531 = dma.vmem_to_hbm [thread:$0]  %s526, 256, %s524, %s507, 128, 128, 8
        $region52: #{tpu_custom_call.1} parent=31 // pred_fallthru
          _
        // Predicated region
        $region53: #{tpu_custom_call.1} parent=31 // pred_check
          %p532 = pneg %p168
        $region54: #{tpu_custom_call.1} parent=31 // pred_check_branch
          %534 = sbr.rel (%p532) target = $region56
        $region55: #{tpu_custom_call.1} parent=31 // pred_region
          %s536 = ssub.s32 256, 256
          %537 = vsyncadd %s512, %s536
          %s538 = smul.addr %s32, 2
          %s539 = smul.addr %s538, 128
          %s540 = scalar_lea.hbm %s4, %s539
          %s541 = sshll.u32 %s515, 4
          %s542 = int_to_ptr.vmem [resolvable:$true] %s541
          %547 = dma.vmem_to_hbm [thread:$0]  %s542, 256, %s540, %s512, 128, 128, 8
        $region56: #{tpu_custom_call.1} parent=31 // pred_fallthru
          _
      $region32: #{tpu_custom_call.1} parent=5 // pred_fallthru
        _
      %p548 = scmp.le.s32.totalorder 2, %s23
      // Predicated region
      $region57: #{tpu_custom_call.1} parent=5 // pred_check
        %p549 = pneg %p548
      $region58: #{tpu_custom_call.1} parent=5 // pred_check_branch
        %551 = sbr.rel (%p549) target = $region60
      $region59: #{tpu_custom_call.1} parent=5 // pred_region
        %s552 = ssub.s32 %s23, 2
        // Predicated region
        $region61: #{tpu_custom_call.1} parent=59 // pred_check
          %p553 = pneg %p148
        $region62: #{tpu_custom_call.1} parent=59 // pred_check_branch
          %555 = sbr.rel (%p553) target = $region64
        $region63: #{tpu_custom_call.1} parent=59 // pred_region
          %s556 = sand.u32 %s133, 1
          %s557 = scalar_lea.sflag [#allocation4], %s556
          %s558 = sand.u32 %s133, 1
          %s559 = smul.addr %s558, 16
          %s560 = scalar_lea.vmem [#allocation8], %s559
          %561 = dma.done %s557, 256
        $region64: #{tpu_custom_call.1} parent=59 // pred_fallthru
          _
        // Predicated region
        $region65: #{tpu_custom_call.1} parent=59 // pred_check
          %p562 = pneg %p174
        $region66: #{tpu_custom_call.1} parent=59 // pred_check_branch
          %564 = sbr.rel (%p562) target = $region68
        $region67: #{tpu_custom_call.1} parent=59 // pred_region
          %s565 = sand.u32 %s159, 1
          %s566 = scalar_lea.sflag [#allocation10], %s565
          %s567 = sand.u32 %s159, 1
          %s568 = smul.addr %s567, 16
          %s569 = scalar_lea.vmem [#allocation9], %s568
          %570 = dma.done %s566, 256
        $region68: #{tpu_custom_call.1} parent=59 // pred_fallthru
          _
      $region60: #{tpu_custom_call.1} parent=5 // pred_fallthru
        _
    $region6: #{tpu_custom_call.1} parent=1 // loop_footer
      %s27 = sadd.s32 1, %s23
    $region7: #{tpu_custom_call.1} parent=1 // loop_footer_branch
      %22 = sbr.rel target = $region3
    $region8: #{tpu_custom_call.1} parent=1 // loop_exit
      _
    %571 = vsyncpa [#allocation3], 1
    %s572 = scalar_lea.sflag [#allocation3], 1
    %573 = vsyncpa %s572, 1
    %574 = vsyncpa [#allocation6], 1
    %s575 = scalar_lea.sflag [#allocation6], 1
    %576 = vsyncpa %s575, 1
    %577 = vsyncpa [#allocation4], 1
    %s578 = scalar_lea.sflag [#allocation4], 1
    %579 = vsyncpa %s578, 1
    %580 = vsyncpa [#allocation10], 1
    %s581 = scalar_lea.sflag [#allocation10], 1
    %582 = vsyncpa %s581, 1

</llo_original>
